<compile_context>
chip_gen: v7x
topology: tpu7x:2x2x1
jax: 0.10.0
libtpu: 0.0.40
codegen_flags: <defaults>
</compile_context>

<pallas_src>
import jax
import jax.numpy as jnp
from jax.experimental import pallas as pl
from jax.experimental.pallas import tpu as pltpu

C_IN = 48
C_OUT = 4

_TARGET_LANE_ELEMS = 8192   # ~1.5 MiB f32 input per block (3 MiB double-buffered)
_MAX_B_BLK = 8              # bound on the unrolled per-image loop inside the kernel


def _outputstack_kernel(x_ref, scale_ref, bias_ref, w_ref, b_ref, o_ref):
    # x_ref:      (B_BLK, 48, TS)  activation block, spatial on lanes
    # scale/bias: (48, 1)          folded BatchNorm affine (elementwise dtype)
    # w_ref:      (4, 48)   f32    spectral-normalized 1x1 conv weight
    # b_ref:      (4, 1)    f32    conv bias
    # o_ref:      (B_BLK, 4, TS)   lane-dense output block
    b_blk = x_ref.shape[0]
    sc = scale_ref[...]
    bs = bias_ref[...]
    w = w_ref[...]
    bc = b_ref[...]

    def body(b, carry):
        x = x_ref[b]                                               # (48, TS)
        h = jnp.maximum(x * sc + bs, 0.0)                          # BN + ReLU (VPU)
        y = jnp.dot(w, h, preferred_element_type=jnp.float32)      # 1x1 conv (MXU)
        o_ref[b] = (y + bc).astype(o_ref.dtype)
        return carry

    jax.lax.fori_loop(0, b_blk, body, 0, unroll=True)


def _choose_tiling(n, hw):
    """Pick (batch block, spatial tile) so each grid step moves ~TARGET lane elements."""
    if hw >= _TARGET_LANE_ELEMS:
        ts = _TARGET_LANE_ELEMS                   # multiple of 128 -> lane-dense
        b_blk = 1
    else:
        ts = hw                                   # full spatial extent (full-dim exemption)
        b_blk = max(1, min(n, _MAX_B_BLK, _TARGET_LANE_ELEMS // max(hw, 1)))
    # v7x: keep >= 2 grid steps along a parallel axis whenever possible (2 TensorCores).
    if n > 1 and pl.cdiv(n, b_blk) * pl.cdiv(hw, ts) < 2:
        b_blk = (n + 1) // 2
    return b_blk, ts


def _spectral_sigma(w2d, n_iter=50):
    """Largest singular value of a small 2-D weight via power iteration.

    Matches PyTorch SpectralNorm's estimator (run to convergence here) and avoids
    lowering jnp.linalg.svd, which becomes a multi-kernel iterative routine on TPU.
    """
    # TODO(synk): PyTorch keeps persistent u/v buffers and does 1 iteration per training
    # forward; at inference the converged value below is the intended sigma.
    u = jnp.full((w2d.shape[0],), 1.0 / jnp.sqrt(float(w2d.shape[0])), jnp.float32)

    def step(_, u):
        v = w2d.T @ u
        v = v / (jnp.linalg.norm(v) + 1e-12)
        u = w2d @ v
        u = u / (jnp.linalg.norm(u) + 1e-12)
        return u

    u = jax.lax.fori_loop(0, n_iter, step, u)
    v = w2d.T @ u
    v = v / (jnp.linalg.norm(v) + 1e-12)
    return jnp.dot(u, w2d @ v)


def output_stack_forward(x_nchw, gamma, beta, run_mean, run_var, conv_w, conv_b,
                         eps=1e-5):
    N, C, H, W = x_nchw.shape
    assert C == C_IN and conv_w.shape == (C_OUT, C_IN, 1, 1)

    # Keep bf16 elementwise math when activations are bf16 (v6e/v7x); f32 otherwise.
    elem_dt = jnp.bfloat16 if x_nchw.dtype == jnp.bfloat16 else jnp.float32

    # ---- parameter glue (tiny, computed once per call) ----
    # BatchNorm2d (eval): y = (x - mean) / sqrt(var + eps) * gamma + beta, folded.
    scale = gamma.astype(jnp.float32) / jnp.sqrt(run_var.astype(jnp.float32) + eps)
    bias = beta.astype(jnp.float32) - run_mean.astype(jnp.float32) * scale

    # SpectralNorm: divide the 1x1 conv weight by its largest singular value.
    w2d = conv_w.reshape(C_OUT, C_IN).astype(jnp.float32)
    w_sn = w2d / _spectral_sigma(w2d)

    # ---- consume NCHW directly: (N, 48, H*W), spatial on the lane axis ----
    HW = H * W
    x3 = x_nchw.reshape(N, C, HW)        # free view, no transpose pass

    B_BLK, TS = _choose_tiling(N, HW)
    grid = (pl.cdiv(N, B_BLK), pl.cdiv(HW, TS))
    # Ragged N / HW tails are safe: padded rows/lanes only flow through the
    # channel-only contraction and OOB elements are masked on store.

    y3 = pl.pallas_call(
        _outputstack_kernel,
        out_shape=jax.ShapeDtypeStruct((N, C_OUT, HW), x_nchw.dtype),
        grid=grid,
        in_specs=[
            pl.BlockSpec((B_BLK, C, TS), lambda n, s: (n, 0, s)),   # activations
            pl.BlockSpec((C, 1), lambda n, s: (0, 0)),              # BN scale
            pl.BlockSpec((C, 1), lambda n, s: (0, 0)),              # BN bias
            pl.BlockSpec((C_OUT, C), lambda n, s: (0, 0)),          # SN conv weight (f32)
            pl.BlockSpec((C_OUT, 1), lambda n, s: (0, 0)),          # conv bias (f32)
        ],
        out_specs=pl.BlockSpec((B_BLK, C_OUT, TS), lambda n, s: (n, 0, s)),
        compiler_params=pltpu.CompilerParams(
            dimension_semantics=("parallel", "parallel")),
    )(x3,
      scale.reshape(C, 1).astype(elem_dt),
      bias.reshape(C, 1).astype(elem_dt),
      w_sn,
      conv_b.reshape(C_OUT, 1).astype(jnp.float32))

    # ---- depth_to_space / pixel_shuffle r=2 on the small (N,4,H,W) output ----
    # out[n, 0, 2h+i, 2w+j] = conv_out[n, i*2+j, h, w]
    # TODO(synk): could be fused in-kernel with lane interleaving (XLU slot is idle), but
    # it touches only ~8% of the input traffic, so it stays as wrapper glue.
    y = y3.reshape(N, 2, 2, H, W)
    y = jnp.transpose(y, (0, 3, 1, 4, 2)).reshape(N, 1, 2 * H, 2 * W)
    return y


def _reference(x_nchw, gamma, beta, run_mean, run_var, conv_w, conv_b, eps=1e-5):
    # Pure-JAX reference for sanity checking.
    N, C, H, W = x_nchw.shape
    xn = (x_nchw - run_mean[None, :, None, None]) / jnp.sqrt(
        run_var[None, :, None, None] + eps)
    xn = xn * gamma[None, :, None, None] + beta[None, :, None, None]
    xn = jnp.maximum(xn, 0.0)
    w2d = conv_w.reshape(C_OUT, C_IN).astype(jnp.float32)
    w_sn = w2d / _spectral_sigma(w2d)
    y = jnp.einsum("nchw,oc->nohw", xn, w_sn) + conv_b[None, :, None, None]
    y = y.reshape(N, 1, 2, 2, H, W)
    y = jnp.transpose(y, (0, 1, 4, 2, 5, 3)).reshape(N, 1, 2 * H, 2 * W)
    return y


if __name__ == "__main__":
    key = jax.random.PRNGKey(0)
    kx, kg, kb, km, kv, kw, kc = jax.random.split(key, 7)

    N, C, H, W = 2, 48, 16, 16
    x = jax.random.normal(kx, (N, C, H, W), dtype=jnp.float32)

    # deterministic synthetic parameters
    gamma = jax.random.normal(kg, (C,), dtype=jnp.float32) * 0.1 + 1.0
    beta = jax.random.normal(kb, (C,), dtype=jnp.float32) * 0.1
    run_mean = jax.random.normal(km, (C,), dtype=jnp.float32) * 0.1
    run_var = jax.random.uniform(kv, (C,), dtype=jnp.float32, minval=0.5, maxval=1.5)
    conv_w = jax.random.normal(kw, (C_OUT, C, 1, 1), dtype=jnp.float32) * 0.1
    conv_b = jax.random.normal(kc, (C_OUT,), dtype=jnp.float32) * 0.1

    out = output_stack_forward(x, gamma, beta, run_mean, run_var, conv_w, conv_b)
    out = jax.block_until_ready(out)

    ref = _reference(x, gamma, beta, run_mean, run_var, conv_w, conv_b)
    assert out.shape == (N, 1, 2 * H, 2 * W), out.shape
    assert jnp.allclose(out, ref, atol=1e-4, rtol=1e-4)

    print("KERNEL_OK")
</pallas_src>

<mosaic_0001>
module attributes {stable_mosaic.version = 11 : i64} {
  func.func @_outputstack_kernel(%arg0: i32, %arg1: i32, %arg2: memref<1x48x256xf32, #tpu.memory_space<vmem>>, %arg3: memref<48x1xf32, #tpu.memory_space<vmem>>, %arg4: memref<48x1xf32, #tpu.memory_space<vmem>>, %arg5: memref<4x48xf32, #tpu.memory_space<vmem>>, %arg6: memref<4x1xf32, #tpu.memory_space<vmem>>, %arg7: memref<1x4x256xf32, #tpu.memory_space<vmem>>) attributes {dimension_semantics = [#tpu.dimension_semantics<parallel>, #tpu.dimension_semantics<parallel>], iteration_bounds = array<i64: 2, 1>, scalar_prefetch = 0 : i64, scratch_operands = 0 : i64, tpu.core_type = #tpu.core_type<tc>, window_params = [{transform_indices = @transform_0, window_bounds = array<i64: 1, 48, 256>}, {pipeline_mode = #tpu.pipeline_mode<synchronous>, transform_indices = @transform_1, window_bounds = array<i64: 48, 1>}, {pipeline_mode = #tpu.pipeline_mode<synchronous>, transform_indices = @transform_2, window_bounds = array<i64: 48, 1>}, {pipeline_mode = #tpu.pipeline_mode<synchronous>, transform_indices = @transform_3, window_bounds = array<i64: 4, 48>}, {pipeline_mode = #tpu.pipeline_mode<synchronous>, transform_indices = @transform_4, window_bounds = array<i64: 4, 1>}, {transform_indices = @transform_5, window_bounds = array<i64: 1, 4, 256>}]} {
    %c0 = arith.constant 0 : index
    %c0_0 = arith.constant 0 : index
    %0 = vector.load %arg3[%c0, %c0_0] : memref<48x1xf32, #tpu.memory_space<vmem>>, vector<48x1xf32>
    %c0_1 = arith.constant 0 : index
    %c0_2 = arith.constant 0 : index
    %1 = vector.load %arg4[%c0_1, %c0_2] : memref<48x1xf32, #tpu.memory_space<vmem>>, vector<48x1xf32>
    %c0_3 = arith.constant 0 : index
    %c0_4 = arith.constant 0 : index
    %2 = vector.load %arg5[%c0_3, %c0_4] : memref<4x48xf32, #tpu.memory_space<vmem>>, vector<4x48xf32>
    %c0_5 = arith.constant 0 : index
    %c0_6 = arith.constant 0 : index
    %3 = vector.load %arg6[%c0_5, %c0_6] : memref<4x1xf32, #tpu.memory_space<vmem>>, vector<4x1xf32>
    %c0_i32 = arith.constant 0 : i32
    %4 = arith.index_cast %c0_i32 : i32 to index
    %c0_7 = arith.constant 0 : index
    %c0_8 = arith.constant 0 : index
    %5 = vector.load %arg2[%4, %c0_7, %c0_8] : memref<1x48x256xf32, #tpu.memory_space<vmem>>, vector<1x48x256xf32>
    %6 = vector.shape_cast %5 : vector<1x48x256xf32> to vector<48x256xf32>
    %7 = vector.broadcast %0 : vector<48x1xf32> to vector<48x256xf32>
    %8 = arith.mulf %6, %7 : vector<48x256xf32>
    %9 = vector.broadcast %1 : vector<48x1xf32> to vector<48x256xf32>
    %10 = arith.addf %8, %9 : vector<48x256xf32>
    %cst = arith.constant 0.000000e+00 : f32
    %11 = vector.broadcast %cst : f32 to vector<48x256xf32>
    %12 = arith.maximumf %10, %11 : vector<48x256xf32>
    %cst_9 = arith.constant dense<0.000000e+00> : vector<4x256xf32>
    %13 = tpu.matmul %2, %12, %cst_9 {dimension_numbers = #tpu.dot_dimension_numbers<[1], [0], [0], [1], [0, 0, 1, 1], [], []>} : vector<4x48xf32>, vector<48x256xf32>, vector<4x256xf32> -> vector<4x256xf32>
    %14 = vector.broadcast %3 : vector<4x1xf32> to vector<4x256xf32>
    %15 = arith.addf %13, %14 : vector<4x256xf32>
    %16 = arith.index_cast %c0_i32 : i32 to index
    %c0_10 = arith.constant 0 : index
    %c0_11 = arith.constant 0 : index
    %17 = vector.load %arg7[%16, %c0_10, %c0_11] : memref<1x4x256xf32, #tpu.memory_space<vmem>>, vector<1x4x256xf32>
    %18 = vector.shape_cast %17 : vector<1x4x256xf32> to vector<4x256xf32>
    %19 = vector.shape_cast %15 : vector<4x256xf32> to vector<1x4x256xf32>
    tpu.vector_store %arg7[%16, %c0_10, %c0_11], %19 {strides = array<i32>} : memref<1x4x256xf32, #tpu.memory_space<vmem>>, vector<1x4x256xf32>,
    %c1_i32 = arith.constant 1 : i32
    return
  }
  func.func @transform_0(%arg0: i32, %arg1: i32) -> (i32, i32, i32) {
    %c0_i32 = arith.constant 0 : i32
    %c0_i32_0 = arith.constant 0 : i32
    return %arg0, %c0_i32, %arg1 : i32, i32, i32
  }
  func.func @transform_1(%arg0: i32, %arg1: i32) -> (i32, i32) {
    %c0_i32 = arith.constant 0 : i32
    %c0_i32_0 = arith.constant 0 : i32
    %c0_i32_1 = arith.constant 0 : i32
    return %c0_i32, %c0_i32_0 : i32, i32
  }
  func.func @transform_2(%arg0: i32, %arg1: i32) -> (i32, i32) {
    %c0_i32 = arith.constant 0 : i32
    %c0_i32_0 = arith.constant 0 : i32
    %c0_i32_1 = arith.constant 0 : i32
    return %c0_i32, %c0_i32_0 : i32, i32
  }
  func.func @transform_3(%arg0: i32, %arg1: i32) -> (i32, i32) {
    %c0_i32 = arith.constant 0 : i32
    %c0_i32_0 = arith.constant 0 : i32
    %c0_i32_1 = arith.constant 0 : i32
    return %c0_i32, %c0_i32_0 : i32, i32
  }
  func.func @transform_4(%arg0: i32, %arg1: i32) -> (i32, i32) {
    %c0_i32 = arith.constant 0 : i32
    %c0_i32_0 = arith.constant 0 : i32
    %c0_i32_1 = arith.constant 0 : i32
    return %c0_i32, %c0_i32_0 : i32, i32
  }
  func.func @transform_5(%arg0: i32, %arg1: i32) -> (i32, i32, i32) {
    %c0_i32 = arith.constant 0 : i32
    %c0_i32_0 = arith.constant 0 : i32
    return %arg0, %c0_i32, %arg1 : i32, i32, i32
  }
}

</mosaic_0001>

<llo_original>
// kernel: tpu_custom_call.1
$region0: #{tpu_custom_call.1}
  #allocation0 [shape = 'u32[]', space=smem, size = 0x4, offset = 0x4, fixed_abs, tag = 'smem constant byte address 0x4 - core index']
  #allocation1 [shape = 'u32[144,128]{1,0:T(1,128)}', space=vmem, size = 0x12000, scoped, tag = 'internal scratch']
  %s0 = inlined_call_operand.hbm [shape: f32[2,48,256], index: 0, kind: input, shape index: {}]
  %s1 = inlined_call_operand.vmem [shape: f32[48,1], index: 1, kind: input, shape index: {}]
  %s2 = inlined_call_operand.vmem [shape: f32[48,1], index: 2, kind: input, shape index: {}]
  %s3 = inlined_call_operand.vmem [shape: f32[4,48], index: 3, kind: input, shape index: {}]
  %s4 = inlined_call_operand.vmem [shape: f32[4,1], index: 4, kind: input, shape index: {}]
  %s5 = inlined_call_operand.hbm [shape: f32[2,4,256], index: 5, kind: output, shape index: {}]
  %s6 = sld [smem:[#allocation0]]
  $region57: #{tpu_custom_call.1} parent=0
    _
  %s8 = ssub.s32 1, %s6
  %s9 = scalar_select 0, %s8, %s6
  $region1: #{tpu_custom_call.1} parent=0
    #allocation2 [shape = 'u8[98304]{0}', space=vmem, size = 0x18000, scoped, tag = 'input window, operand 0']
    #allocation3 [shape = 's32[2]{0}', space=sflag, size = 0x8, scoped, tag = 'scoped memory for tpu_custom_call.1']
    #allocation4 [shape = 's32[2]{0}', space=sflag, size = 0x8, scoped, tag = 'scoped memory for tpu_custom_call.1']
    #allocation5 [shape = 'u8[8192]{0}', space=vmem, size = 0x2000, scoped, tag = 'output window, operand 0']
    %10 = vsyncpa [#allocation3], 0
    %s11 = scalar_lea.sflag [#allocation3], 1
    %12 = vsyncpa %s11, 0
    %13 = vsyncpa [#allocation4], 0
    %s14 = scalar_lea.sflag [#allocation4], 1
    %15 = vsyncpa %s14, 0
    loop: start=0, step=1, limit=4
    $region2: #{tpu_custom_call.1} parent=1 // loop_pre_header
      _
    $region3: #{tpu_custom_call.1} parent=1 // loop_header
      %s17 = sphi 0, %s21
      %p18 = scmp.ge.s32.totalorder %s17, 4
      %s24 = sphi 0, %s36
      %s25 = sphi 0, %s32
      %s26 = sphi 0, %s24
      %s27 = sphi 0, %s25
      %s28 = sphi 0, %s26
      %s29 = sphi 0, %s27
      %s41 = sphi 0, %s43
      %s44 = sphi 0, %s41
      %s45 = sphi 0, %s44
      %s61 = sphi 0, %s45
      %s65 = sphi 0, %s65
      %s67 = sphi 0, %s65
      %s68 = sphi 0, %s67
      %s82 = sphi 0, %s68
      %s86 = sphi 0, %s86
      %s88 = sphi 0, %s86
      %s89 = sphi 0, %s88
      %s103 = sphi 0, %s89
      %s107 = sphi 0, %s107
      %s109 = sphi 0, %s107
      %s110 = sphi 0, %s109
      %s124 = sphi 0, %s110
      %s128 = sphi 0, %s128
      %s130 = sphi 0, %s128
      %s131 = sphi 0, %s130
      %s145 = sphi 0, %s131
      %s153 = sphi 0, %s155
      %s156 = sphi 0, %s153
      %s157 = sphi 0, %s156
      %s173 = sphi 0, %s157
    $region4: #{tpu_custom_call.1} parent=1 // loop_header_branch
      %20 = sbr.rel (%p18) target = $region8
    $region5: #{tpu_custom_call.1} parent=1 // loop_body
      %s22 = ssub.s32 %s17, 1
      %s23 = ssub.s32 %s17, 2
      %s30 = sadd.s32 1, %s25
      %p31 = scmp.ge.s32.totalorder %s30, 1
      %s32 = scalar_select %p31, 0, %s30
      %s33 = sadd.s32 1, %s24
      %s34 = scalar_select %p31, %s33, %s24
      %p35 = scmp.ge.s32.totalorder %s34, 2
      %s36 = scalar_select %p35, 0, %s34
      %s37 = ssub.s32 %s24, %s36
      %s38 = ssub.s32 %s25, %s32
      %s39 = sor.u32 %s37, %s38
      %p40 = scmp.eq.s32.totalorder %s39, 0
      %s42 = sadd.s32 %s41, 1
      %s43 = scalar_select %p40, %s41, %s42
      %p46 = pneg %p40
      %p47 = scmp.eq.s32.totalorder %s17, 1
      %p48 = por %p46, %p47
      %p49 = scmp.ne.s32.totalorder %s41, %s44
      %p50 = scmp.eq.s32.totalorder %s17, 0
      %p51 = por %p49, %p50
      %p52 = scmp.ne.s32.totalorder %s41, %s44
      %p53 = scmp.eq.s32.totalorder %s22, 1
      %p54 = por %p52, %p53
      %p55 = scmp.ne.s32.totalorder %s44, %s45
      %p56 = scmp.eq.s32.totalorder %s22, 0
      %p57 = por %p55, %p56
      %p58 = scmp.ne.s32.totalorder %s44, %s45
      %p59 = scmp.eq.s32.totalorder %s23, 1
      %p60 = por %p58, %p59
      %p62 = scmp.ne.s32.totalorder %s45, %s61
      %p63 = scmp.eq.s32.totalorder %s23, 0
      %p64 = por %p62, %p63
      %s66 = sadd.s32 %s65, 1
      %p69 = scmp.eq.s32.totalorder %s17, 1
      %p70 = scmp.ne.s32.totalorder %s65, %s67
      %p71 = scmp.eq.s32.totalorder %s17, 0
      %p72 = por %p70, %p71
      %p73 = scmp.ne.s32.totalorder %s65, %s67
      %p74 = scmp.eq.s32.totalorder %s22, 1
      %p75 = por %p73, %p74
      %p76 = scmp.ne.s32.totalorder %s67, %s68
      %p77 = scmp.eq.s32.totalorder %s22, 0
      %p78 = por %p76, %p77
      %p79 = scmp.ne.s32.totalorder %s67, %s68
      %p80 = scmp.eq.s32.totalorder %s23, 1
      %p81 = por %p79, %p80
      %p83 = scmp.ne.s32.totalorder %s68, %s82
      %p84 = scmp.eq.s32.totalorder %s23, 0
      %p85 = por %p83, %p84
      %s87 = sadd.s32 %s86, 1
      %p90 = scmp.eq.s32.totalorder %s17, 1
      %p91 = scmp.ne.s32.totalorder %s86, %s88
      %p92 = scmp.eq.s32.totalorder %s17, 0
      %p93 = por %p91, %p92
      %p94 = scmp.ne.s32.totalorder %s86, %s88
      %p95 = scmp.eq.s32.totalorder %s22, 1
      %p96 = por %p94, %p95
      %p97 = scmp.ne.s32.totalorder %s88, %s89
      %p98 = scmp.eq.s32.totalorder %s22, 0
      %p99 = por %p97, %p98
      %p100 = scmp.ne.s32.totalorder %s88, %s89
      %p101 = scmp.eq.s32.totalorder %s23, 1
      %p102 = por %p100, %p101
      %p104 = scmp.ne.s32.totalorder %s89, %s103
      %p105 = scmp.eq.s32.totalorder %s23, 0
      %p106 = por %p104, %p105
      %s108 = sadd.s32 %s107, 1
      %p111 = scmp.eq.s32.totalorder %s17, 1
      %p112 = scmp.ne.s32.totalorder %s107, %s109
      %p113 = scmp.eq.s32.totalorder %s17, 0
      %p114 = por %p112, %p113
      %p115 = scmp.ne.s32.totalorder %s107, %s109
      %p116 = scmp.eq.s32.totalorder %s22, 1
      %p117 = por %p115, %p116
      %p118 = scmp.ne.s32.totalorder %s109, %s110
      %p119 = scmp.eq.s32.totalorder %s22, 0
      %p120 = por %p118, %p119
      %p121 = scmp.ne.s32.totalorder %s109, %s110
      %p122 = scmp.eq.s32.totalorder %s23, 1
      %p123 = por %p121, %p122
      %p125 = scmp.ne.s32.totalorder %s110, %s124
      %p126 = scmp.eq.s32.totalorder %s23, 0
      %p127 = por %p125, %p126
      %s129 = sadd.s32 %s128, 1
      %p132 = scmp.eq.s32.totalorder %s17, 1
      %p133 = scmp.ne.s32.totalorder %s128, %s130
      %p134 = scmp.eq.s32.totalorder %s17, 0
      %p135 = por %p133, %p134
      %p136 = scmp.ne.s32.totalorder %s128, %s130
      %p137 = scmp.eq.s32.totalorder %s22, 1
      %p138 = por %p136, %p137
      %p139 = scmp.ne.s32.totalorder %s130, %s131
      %p140 = scmp.eq.s32.totalorder %s22, 0
      %p141 = por %p139, %p140
      %p142 = scmp.ne.s32.totalorder %s130, %s131
      %p143 = scmp.eq.s32.totalorder %s23, 1
      %p144 = por %p142, %p143
      %p146 = scmp.ne.s32.totalorder %s131, %s145
      %p147 = scmp.eq.s32.totalorder %s23, 0
      %p148 = por %p146, %p147
      %s149 = ssub.s32 %s24, %s36
      %s150 = ssub.s32 %s25, %s32
      %s151 = sor.u32 %s149, %s150
      %p152 = scmp.eq.s32.totalorder %s151, 0
      %s154 = sadd.s32 %s153, 1
      %s155 = scalar_select %p152, %s153, %s154
      %p158 = pneg %p152
      %p159 = scmp.eq.s32.totalorder %s17, 1
      %p160 = por %p158, %p159
      %p161 = scmp.ne.s32.totalorder %s153, %s156
      %p162 = scmp.eq.s32.totalorder %s17, 0
      %p163 = por %p161, %p162
      %p164 = scmp.ne.s32.totalorder %s153, %s156
      %p165 = scmp.eq.s32.totalorder %s22, 1
      %p166 = por %p164, %p165
      %p167 = scmp.ne.s32.totalorder %s156, %s157
      %p168 = scmp.eq.s32.totalorder %s22, 0
      %p169 = por %p167, %p168
      %p170 = scmp.ne.s32.totalorder %s156, %s157
      %p171 = scmp.eq.s32.totalorder %s23, 1
      %p172 = por %p170, %p171
      %p174 = scmp.ne.s32.totalorder %s157, %s173
      %p175 = scmp.eq.s32.totalorder %s23, 0
      %p176 = por %p174, %p175
      %p177 = scmp.le.s32.totalorder 1, %s17
      %p178 = scmp.lt.s32.totalorder %s17, 3
      %p179 = pnand %p177, %p178
      %p180 = pneg %p179
      // Predicated region
      $region9: #{tpu_custom_call.1} parent=5 // pred_check
        _
      $region10: #{tpu_custom_call.1} parent=5 // pred_check_branch
        %182 = sbr.rel (%p179) target = $region12
      $region11: #{tpu_custom_call.1} parent=5 // pred_region
        %s183 = ssub.s32 %s17, 1
        // Predicated region
        $region13: #{tpu_custom_call.1} parent=11 // pred_check
          %p184 = pneg %p78
        $region14: #{tpu_custom_call.1} parent=11 // pred_check_branch
          %186 = sbr.rel (%p184) target = $region16
        $region15: #{tpu_custom_call.1} parent=11 // pred_region
          _
        $region16: #{tpu_custom_call.1} parent=11 // pred_fallthru
          _
        // Predicated region
        $region17: #{tpu_custom_call.1} parent=11 // pred_check
          %p187 = pneg %p99
        $region18: #{tpu_custom_call.1} parent=11 // pred_check_branch
          %189 = sbr.rel (%p187) target = $region20
        $region19: #{tpu_custom_call.1} parent=11 // pred_region
          _
        $region20: #{tpu_custom_call.1} parent=11 // pred_fallthru
          _
        // Predicated region
        $region21: #{tpu_custom_call.1} parent=11 // pred_check
          %p190 = pneg %p120
        $region22: #{tpu_custom_call.1} parent=11 // pred_check_branch
          %192 = sbr.rel (%p190) target = $region24
        $region23: #{tpu_custom_call.1} parent=11 // pred_region
          _
        $region24: #{tpu_custom_call.1} parent=11 // pred_fallthru
          _
        // Predicated region
        $region25: #{tpu_custom_call.1} parent=11 // pred_check
          %p193 = pneg %p141
        $region26: #{tpu_custom_call.1} parent=11 // pred_check_branch
          %195 = sbr.rel (%p193) target = $region28
        $region27: #{tpu_custom_call.1} parent=11 // pred_region
          _
        $region28: #{tpu_custom_call.1} parent=11 // pred_fallthru
          _
      $region12: #{tpu_custom_call.1} parent=5 // pred_fallthru
        _
      %p196 = scmp.lt.s32.totalorder %s17, 2
      // Predicated region
      $region29: #{tpu_custom_call.1} parent=5 // pred_check
        %p197 = pneg %p196
      $region30: #{tpu_custom_call.1} parent=5 // pred_check_branch
        %199 = sbr.rel (%p197) target = $region32
      $region31: #{tpu_custom_call.1} parent=5 // pred_region
        // Predicated region
        $region33: #{tpu_custom_call.1} parent=31 // pred_check
          %p200 = pneg %p51
        $region34: #{tpu_custom_call.1} parent=31 // pred_check_branch
          %202 = sbr.rel (%p200) target = $region36
        $region35: #{tpu_custom_call.1} parent=31 // pred_region
          %s203 = sand.u32 %s41, 1
          %s204 = scalar_lea.sflag [#allocation3], %s203
          %s205 = sand.u32 %s41, 1
          %s206 = smul.addr %s205, 96
          %s207 = scalar_lea.vmem [#allocation2], %s206
          %s208 = smul.u32 2, %s25
          %s210 = ssub.s32 1536, 1536
          %211 = vsyncadd %s204, %s210
          %s212 = smul.addr %s24, 12
          %s213 = sadd.s32 %s208, %s212
          %s214 = smul.addr %s213, 128
          %s215 = scalar_lea.hbm %s0, %s214
          %s216 = sshll.u32 %s207, 4
          %s217 = int_to_ptr.vmem [resolvable:$true] %s216
          %222 = dma.hbm_to_vmem [thread:$0]  %s215, 1536, %s217, %s204, 256, 256, 16
        $region36: #{tpu_custom_call.1} parent=31 // pred_fallthru
          _
      $region32: #{tpu_custom_call.1} parent=5 // pred_fallthru
        _
      %p223 = scmp.le.s32.totalorder 1, %s17
      %p224 = scmp.lt.s32.totalorder %s17, 3
      %p225 = pnand %p223, %p224
      %p226 = pneg %p225
      // Predicated region
      $region37: #{tpu_custom_call.1} parent=5 // pred_check
        _
      $region38: #{tpu_custom_call.1} parent=5 // pred_check_branch
        %228 = sbr.rel (%p225) target = $region40
      $region39: #{tpu_custom_call.1} parent=5 // pred_region
        %s229 = ssub.s32 %s17, 1
        %s230 = sand.u32 %s44, 1
        %s231 = scalar_lea.sflag [#allocation3], %s230
        %s232 = sand.u32 %s44, 1
        %s233 = smul.addr %s232, 96
        %s234 = scalar_lea.vmem [#allocation2], %s233
        // Predicated region
        $region41: #{tpu_custom_call.1} parent=39 // pred_check
          %p235 = pneg %p57
        $region42: #{tpu_custom_call.1} parent=39 // pred_check_branch
          %237 = sbr.rel (%p235) target = $region44
        $region43: #{tpu_custom_call.1} parent=39 // pred_region
          %238 = dma.done %s231, 1536
        $region44: #{tpu_custom_call.1} parent=39 // pred_fallthru
          _
        %s239 = sand.u32 %s44, 1
        %s240 = scalar_lea.sflag [#allocation3], %s239
        %s241 = sand.u32 %s44, 1
        %s242 = smul.addr %s241, 96
        %s243 = scalar_lea.vmem [#allocation2], %s242
        %p244 = pneg %p57
        %p245 = pneg %p54
        %p246 = pneg %p78
        %p247 = pneg %p75
        %p248 = pneg %p99
        %p249 = pneg %p96
        %p250 = pneg %p120
        %p251 = pneg %p117
        %p252 = pneg %p141
        %p253 = pneg %p138
        %p254 = pneg %p169
        %p255 = pneg %p166
        %s256 = sand.u32 %s156, 1
        %s257 = scalar_lea.sflag [#allocation4], %s256
        %s258 = sand.u32 %s156, 1
        %s259 = smul.addr %s258, 8
        %s260 = scalar_lea.vmem [#allocation5], %s259
        %s261 = smul.u32 2, %s27
        %s262 = smul.u32 2, %s27
        %v263 = vld [vmem:[%s1] sm:$0xff]
        %v264 = vld [vmem:[%s1 + $0x8] sm:$0xff]
        %v265 = vld [vmem:[%s1 + $0x10] sm:$0xff]
        %v266 = vld [vmem:[%s1 + $0x18] sm:$0xff]
        %v267 = vld [vmem:[%s1 + $0x20] sm:$0xff]
        %v268 = vld [vmem:[%s1 + $0x28] sm:$0xff]
        %v269 = vld [vmem:[%s2] sm:$0xff]
        %v270 = vld [vmem:[%s2 + $0x8] sm:$0xff]
        %v271 = vld [vmem:[%s2 + $0x10] sm:$0xff]
        %v272 = vld [vmem:[%s2 + $0x18] sm:$0xff]
        %v273 = vld [vmem:[%s2 + $0x20] sm:$0xff]
        %v274 = vld [vmem:[%s2 + $0x28] sm:$0xff]
        %v275 = vld [vmem:[%s3] sm:$0xf]
        %v276 = vld [vmem:[%s4] sm:$0xf]
        %v277 = vld [vmem:[%s234] sm:$0xff]
        %v278 = vld [vmem:[%s234 + $0x8] sm:$0xff]
        %v279 = vld [vmem:[%s234 + $0x10] sm:$0xff]
        %v280 = vld [vmem:[%s234 + $0x18] sm:$0xff]
        %v281 = vld [vmem:[%s234 + $0x20] sm:$0xff]
        %v282 = vld [vmem:[%s234 + $0x28] sm:$0xff]
        %v283 = vld [vmem:[%s234 + $0x30] sm:$0xff]
        %v284 = vld [vmem:[%s234 + $0x38] sm:$0xff]
        %v285 = vld [vmem:[%s234 + $0x40] sm:$0xff]
        %v286 = vld [vmem:[%s234 + $0x48] sm:$0xff]
        %v287 = vld [vmem:[%s234 + $0x50] sm:$0xff]
        %v288 = vld [vmem:[%s234 + $0x58] sm:$0xff]
        %290 = vset.pattern.permute.xlu0 0
        %291 = vperm.xlu0 %290, %v263
        %v292 = vpop.permute.xlu0 %291
        %295 = vset.pattern.permute.xlu0 0
        %296 = vperm.xlu0 %295, %v264
        %v297 = vpop.permute.xlu0 %296
        %300 = vset.pattern.permute.xlu0 0
        %301 = vperm.xlu0 %300, %v265
        %v302 = vpop.permute.xlu0 %301
        %305 = vset.pattern.permute.xlu0 0
        %306 = vperm.xlu0 %305, %v266
        %v307 = vpop.permute.xlu0 %306
        %310 = vset.pattern.permute.xlu0 0
        %311 = vperm.xlu0 %310, %v267
        %v312 = vpop.permute.xlu0 %311
        %315 = vset.pattern.permute.xlu0 0
        %316 = vperm.xlu0 %315, %v268
        %v317 = vpop.permute.xlu0 %316
        %v319 = vmul.f32 %v277, %v292
        %v320 = vmul.f32 %v278, %v292
        %v321 = vmul.f32 %v279, %v297
        %v322 = vmul.f32 %v280, %v297
        %v323 = vmul.f32 %v281, %v302
        %v324 = vmul.f32 %v282, %v302
        %v325 = vmul.f32 %v283, %v307
        %v326 = vmul.f32 %v284, %v307
        %v327 = vmul.f32 %v285, %v312
        %v328 = vmul.f32 %v286, %v312
        %v329 = vmul.f32 %v287, %v317
        %v330 = vmul.f32 %v288, %v317
        %332 = vset.pattern.permute.xlu0 0
        %333 = vperm.xlu0 %332, %v269
        %v334 = vpop.permute.xlu0 %333
        %337 = vset.pattern.permute.xlu0 0
        %338 = vperm.xlu0 %337, %v270
        %v339 = vpop.permute.xlu0 %338
        %342 = vset.pattern.permute.xlu0 0
        %343 = vperm.xlu0 %342, %v271
        %v344 = vpop.permute.xlu0 %343
        %347 = vset.pattern.permute.xlu0 0
        %348 = vperm.xlu0 %347, %v272
        %v349 = vpop.permute.xlu0 %348
        %352 = vset.pattern.permute.xlu0 0
        %353 = vperm.xlu0 %352, %v273
        %v354 = vpop.permute.xlu0 %353
        %357 = vset.pattern.permute.xlu0 0
        %358 = vperm.xlu0 %357, %v274
        %v359 = vpop.permute.xlu0 %358
        %v361 = vadd.f32 %v319, %v334
        %v362 = vadd.f32 %v320, %v334
        %v363 = vadd.f32 %v321, %v339
        %v364 = vadd.f32 %v322, %v339
        %v365 = vadd.f32 %v323, %v344
        %v366 = vadd.f32 %v324, %v344
        %v367 = vadd.f32 %v325, %v349
        %v368 = vadd.f32 %v326, %v349
        %v369 = vadd.f32 %v327, %v354
        %v370 = vadd.f32 %v328, %v354
        %v371 = vadd.f32 %v329, %v359
        %v372 = vadd.f32 %v330, %v359
        %v373 = vmax.f32 %v361, 0.0
        %v374 = vmax.f32 %v362, 0.0
        %v375 = vmax.f32 %v363, 0.0
        %v376 = vmax.f32 %v364, 0.0
        %v377 = vmax.f32 %v365, 0.0
        %v378 = vmax.f32 %v366, 0.0
        %v379 = vmax.f32 %v367, 0.0
        %v380 = vmax.f32 %v368, 0.0
        %v381 = vmax.f32 %v369, 0.0
        %v382 = vmax.f32 %v370, 0.0
        %v383 = vmax.f32 %v371, 0.0
        %v384 = vmax.f32 %v372, 0.0
        %386 = vset.pattern.permute.xlu0 0
        %387 = vperm.xlu0 %386, %v276
        %v388 = vpop.permute.xlu0 %387
        %vm390 = vcmask 392192
        %v392 = vsel %vm390, %v275, 0
        %394 = vmatprep.subr.mxu0 %v374
        %395 = vmatpush1.msra.mxu0 %v373
        %396 = vmatprep.subr.mxu0 %v376
        %397 = vmatpush1.msra.mxu0 %v375
        %398 = vmatprep.subr.mxu0 %v378
        %399 = vmatpush1.msra.mxu0 %v377
        %400 = vmatprep.subr.mxu0 %v380
        %401 = vmatpush1.msra.mxu0 %v379
        %402 = vmatprep.subr.mxu0 %v382
        %403 = vmatpush1.msra.mxu0 %v381
        %404 = vmatprep.subr.mxu0 %v384
        %405 = vmatpush1.msra.mxu0 %v383
        %406 = vmatprep.subr.mxu0 0.0
        %407 = vmatpush1.msra.mxu0 0.0
        %408 = vmatprep.subr.mxu0 0.0
        %409 = vmatpush1.msra.mxu0 0.0
        %410 = vmatprep.subr.mxu0 0.0
        %411 = vmatpush1.msra.mxu0 0.0
        %412 = vmatprep.subr.mxu0 0.0
        %413 = vmatpush1.msra.mxu0 0.0
        %414 = vmatprep.subr.mxu0 0.0
        %415 = vmatpush1.msra.mxu0 0.0
        %416 = vmatprep.subr.mxu0 0.0
        %417 = vmatpush1.msra.mxu0 0.0
        %418 = vmatprep.subr.mxu0 0.0
        %419 = vmatpush1.msra.mxu0 0.0
        %420 = vmatprep.subr.mxu0 0.0
        %421 = vmatpush1.msra.mxu0 0.0
        %422 = vmatprep.subr.mxu0 0.0
        %423 = vmatpush1.msra.mxu0 0.0
        %424 = vmatprep.subr.mxu0 0.0
        %425 = vmatpush1.msra.mxu0 0.0
        %426 = vmatprep.subr.mxu0 0.0
        %427 = vmatpush1.msra.mxu0 0.0
        %428 = vmatprep.subr.mxu0 0.0
        %429 = vmatpush1.msra.mxu0 0.0
        %430 = vmatprep.subr.mxu0 0.0
        %431 = vmatpush1.msra.mxu0 0.0
        %432 = vmatprep.subr.mxu0 0.0
        %433 = vmatpush1.msra.mxu0 0.0
        %434 = vmatprep.subr.mxu0 0.0
        %435 = vmatpush1.msra.mxu0 0.0
        %436 = vmatprep.subr.mxu0 0.0
        %437 = vmatpush1.msra.mxu0 0.0
        %438 = vmatprep.subr.mxu0 0.0
        %439 = vmatpush1.msra.mxu0 0.0
        %440 = vmatprep.subr.mxu0 0.0
        %441 = vmatpush1.msra.mxu0 0.0
        %442 = vmatprep.subr.mxu0 0.0
        %443 = vmatpush1.msra.mxu0 0.0
        %444 = vmatprep.subr.mxu0 0.0
        %445 = vmatpush1.msra.mxu0 0.0
        %446 = vmatprep.subr.mxu0 0.0
        %447 = vmatpush1.msra.mxu0 0.0
        %448 = vmatprep.subr.mxu0 0.0
        %449 = vmatpush1.msra.mxu0 0.0
        %450 = vmatprep.subr.mxu0 0.0
        %451 = vmatpush1.msra.mxu0 0.0
        %452 = vmatprep.subr.mxu0 0.0
        %453 = vmatpush1.msra.mxu0 0.0
        %454 = vmatprep.subr.mxu0 0.0
        %455 = vmatpush1.msra.mxu0 0.0
        %456 = vmatprep.subr.mxu0 0.0
        %457 = vmatpush1.msra.mxu0 0.0
        %458 = vmatprep.mubr.f32.mxu0 0.0
        %459 = vmatmul.mubr.f32.gmra.mrb[0].mxu0 %v392
        %v460 = vpop.f32.mrb[0].mxu0
        %v461 = vadd.f32 %v388, %v460
        %v462 = vpop.f32.mrb[0].mxu0
        %v463 = vadd.f32 %v388, %v462
        %464 = vdwg.mxu0
        %v467 = vcombine.low %v461, %v463
        %469 = vst [vmem:[%s260] sm:$0xff] %v467
        %s470 = sand.u32 %s156, 1
        %s471 = scalar_lea.sflag [#allocation4], %s470
        %s472 = sand.u32 %s156, 1
        %s473 = smul.addr %s472, 8
        %s474 = scalar_lea.vmem [#allocation5], %s473
        // Predicated region
        $region45: #{tpu_custom_call.1} parent=39 // pred_check
          %p475 = pneg %p166
        $region46: #{tpu_custom_call.1} parent=39 // pred_check_branch
          %477 = sbr.rel (%p475) target = $region48
        $region47: #{tpu_custom_call.1} parent=39 // pred_region
          %s478 = smul.u32 2, %s27
          %s480 = ssub.s32 128, 128
          %481 = vsyncadd %s471, %s480
          %s482 = smul.addr %s26, 2
          %s483 = sadd.s32 %s478, %s482
          %s484 = smul.addr %s483, 64
          %s485 = scalar_lea.hbm %s5, %s484
          %s487 = sshll.u32 %s474, 4
          %s488 = int_to_ptr.vmem [resolvable:$true] %s487
          %490 = dma.vmem_to_hbm [thread:$0]  %s488, 128, %s485, %s471
        $region48: #{tpu_custom_call.1} parent=39 // pred_fallthru
          _
      $region40: #{tpu_custom_call.1} parent=5 // pred_fallthru
        _
      %p491 = scmp.le.s32.totalorder 2, %s17
      // Predicated region
      $region49: #{tpu_custom_call.1} parent=5 // pred_check
        %p492 = pneg %p491
      $region50: #{tpu_custom_call.1} parent=5 // pred_check_branch
        %494 = sbr.rel (%p492) target = $region52
      $region51: #{tpu_custom_call.1} parent=5 // pred_region
        %s495 = ssub.s32 %s17, 2
        // Predicated region
        $region53: #{tpu_custom_call.1} parent=51 // pred_check
          %p496 = pneg %p172
        $region54: #{tpu_custom_call.1} parent=51 // pred_check_branch
          %498 = sbr.rel (%p496) target = $region56
        $region55: #{tpu_custom_call.1} parent=51 // pred_region
          %s499 = sand.u32 %s157, 1
          %s500 = scalar_lea.sflag [#allocation4], %s499
          %s501 = sand.u32 %s157, 1
          %s502 = smul.addr %s501, 8
          %s503 = scalar_lea.vmem [#allocation5], %s502
          %504 = dma.done %s500, 128
        $region56: #{tpu_custom_call.1} parent=51 // pred_fallthru
          _
      $region52: #{tpu_custom_call.1} parent=5 // pred_fallthru
        _
    $region6: #{tpu_custom_call.1} parent=1 // loop_footer
      %s21 = sadd.s32 1, %s17
    $region7: #{tpu_custom_call.1} parent=1 // loop_footer_branch
      %16 = sbr.rel target = $region3
    $region8: #{tpu_custom_call.1} parent=1 // loop_exit
      _
    %505 = vsyncpa [#allocation3], 1
    %s506 = scalar_lea.sflag [#allocation3], 1
    %507 = vsyncpa %s506, 1
    %508 = vsyncpa [#allocation4], 1
    %s509 = scalar_lea.sflag [#allocation4], 1
    %510 = vsyncpa %s509, 1

</llo_original>
